<compile_context>
chip_gen: v6e
topology: v6e:2x2x1
jax: 0.10.0
libtpu: 0.0.40
codegen_flags: <defaults>
</compile_context>

<pallas_src>
import functools

import jax
import jax.numpy as jnp
from jax.experimental import pallas as pl
from jax.experimental.pallas import tpu as pltpu

HIDDEN = 32
N_FINE = 21
N_SENT = 4
N_OUT = N_FINE + N_SENT  # 25 — single lane-contiguous output slab


def _round_up(x, m):
    return (x + m - 1) // m * m


def calo_classifier_kernel(x_ref, w1_ref, b1_ref, w2_ref, b2_ref, out_ref):
    # Fused first layers of both heads: one (tb, H) @ (H, 2H) matmul.
    h = jnp.dot(x_ref[...], w1_ref[...], preferred_element_type=jnp.float32) + b1_ref[...]
    h = jnp.maximum(h, 0.0)  # ReLU; Dropout = identity at inference
    # Fused second layers: block-diagonal (2H, 25) keeps the heads independent,
    # single (tb, 25) output store.
    out_ref[...] = (
        jnp.dot(h, w2_ref[...], preferred_element_type=jnp.float32) + b2_ref[...]
    )


def _weight_norm_effective(v, g):
    # PyTorch weight_norm(dim=None):  W = g * v / ||v||_F ,  g scalar
    return g * v / jnp.linalg.norm(v)


def init_params(key, hidden_size):
    """Synthetic parameters mirroring the PyTorch module's shapes.

    PyTorch Linear weight is (out, in); we keep v in that shape, apply the
    weight-norm normalization, transpose to (in, out), then pack both heads
    into fused (W1, b1, W2, b2) for the kernel. Returns (packed, raw).
    """
    ks = jax.random.split(key, 8)

    def make_layer(kw, kb, out_dim, in_dim):
        v = jax.random.normal(kw, (out_dim, in_dim), jnp.float32) * 0.05
        g = jnp.linalg.norm(v)                      # weight_norm init: g = ||v||_F
        b = jax.random.normal(kb, (out_dim,), jnp.float32) * 0.01
        w_eff = _weight_norm_effective(v, g).T      # (in, out)
        return w_eff, b.reshape(1, out_dim)

    w1f, b1f = make_layer(ks[0], ks[1], hidden_size, hidden_size)
    w2f, b2f = make_layer(ks[2], ks[3], N_FINE, hidden_size)
    w1s, b1s = make_layer(ks[4], ks[5], hidden_size, hidden_size)
    w2s, b2s = make_layer(ks[6], ks[7], N_SENT, hidden_size)

    # --- one-time packing for the fused kernel (outside the kernel on purpose) ---
    # First layers: concat along output dim -> (H, 2H), (1, 2H)
    w1 = jnp.concatenate([w1f, w1s], axis=1)
    b1 = jnp.concatenate([b1f, b1s], axis=1)
    # Second layers: block-diagonal (2H, 25); zeros keep heads independent (exact).
    w2 = jnp.zeros((2 * hidden_size, N_OUT), jnp.float32)
    w2 = w2.at[:hidden_size, :N_FINE].set(w2f)
    w2 = w2.at[hidden_size:, N_FINE:].set(w2s)
    b2 = jnp.concatenate([b2f, b2s], axis=1)

    packed = (w1, b1, w2, b2)
    raw = (w1f, b1f, w2f, b2f, w1s, b1s, w2s, b2s)  # for the pure-JAX reference
    return packed, raw


@functools.partial(jax.jit, static_argnames=("batch_tile",))
def calo_classifier(emotion_state, packed_params, *, batch_tile=512):
    """Returns (fine_emotion_logits (B,21), sentiment_logits (B,4))."""
    w1, b1, w2, b2 = packed_params
    B, H = emotion_state.shape

    # Batch tiling: sublane-aligned tile; 512 is a multiple of 256 (v6e/v7x MXU)
    # and 128 (v5e), and large enough to amortize per-grid-step overhead.
    tb = batch_tile if B >= batch_tile else _round_up(B, 8)
    Bp = _round_up(B, tb)
    if Bp != B:
        x = jnp.zeros((Bp, H), emotion_state.dtype).at[:B].set(emotion_state)
    else:
        x = emotion_state

    grid = (Bp // tb,)
    flops = 2 * Bp * (H * 2 * H + 2 * H * N_OUT)
    bytes_accessed = (
        Bp * H * 4
        + Bp * N_OUT * 4
        + (w1.size + b1.size + w2.size + b2.size) * 4
    )

    out = pl.pallas_call(
        calo_classifier_kernel,
        out_shape=jax.ShapeDtypeStruct((Bp, N_OUT), jnp.float32),
        grid=grid,
        in_specs=[
            pl.BlockSpec((tb, H), lambda i: (i, 0)),         # x: tiled over batch
            pl.BlockSpec((H, 2 * H), lambda i: (0, 0)),      # weights: VMEM-resident
            pl.BlockSpec((1, 2 * H), lambda i: (0, 0)),
            pl.BlockSpec((2 * H, N_OUT), lambda i: (0, 0)),
            pl.BlockSpec((1, N_OUT), lambda i: (0, 0)),
        ],
        out_specs=pl.BlockSpec((tb, N_OUT), lambda i: (i, 0)),
        compiler_params=pltpu.CompilerParams(
            dimension_semantics=("parallel",)),
        cost_estimate=pl.CostEstimate(
            flops=flops, transcendentals=0, bytes_accessed=bytes_accessed),
    )(x, w1, b1, w2, b2)

    out = out[:B]
    return out[:, :N_FINE], out[:, N_FINE:]


def _reference(emotion_state, raw_params):
    w1f, b1f, w2f, b2f, w1s, b1s, w2s, b2s = raw_params
    hf = jnp.maximum(emotion_state @ w1f + b1f, 0.0)
    fine = hf @ w2f + b2f
    hs = jnp.maximum(emotion_state @ w1s + b1s, 0.0)
    sent = hs @ w2s + b2s
    return fine, sent


if __name__ == "__main__":
    key = jax.random.PRNGKey(0)
    k_x, k_p, k_x2 = jax.random.split(key, 3)

    packed, raw = init_params(k_p, HIDDEN)

    # Small-batch case (single grid step, padded to 8 sublanes).
    B = 4
    emotion_state = jax.random.normal(k_x, (B, HIDDEN), jnp.float32)
    fine, sent = calo_classifier(emotion_state, packed)
    jax.block_until_ready((fine, sent))

    ref_fine, ref_sent = _reference(emotion_state, raw)
    assert fine.shape == (B, N_FINE) and sent.shape == (B, N_SENT)
    assert jnp.allclose(fine, ref_fine, atol=1e-5, rtol=1e-5)
    assert jnp.allclose(sent, ref_sent, atol=1e-5, rtol=1e-5)

    # Larger, non-aligned batch exercises the parallel batch grid + padding path.
    B2 = 1037
    emotion_state2 = jax.random.normal(k_x2, (B2, HIDDEN), jnp.float32)
    fine2, sent2 = calo_classifier(emotion_state2, packed)
    jax.block_until_ready((fine2, sent2))

    ref_fine2, ref_sent2 = _reference(emotion_state2, raw)
    assert fine2.shape == (B2, N_FINE) and sent2.shape == (B2, N_SENT)
    assert jnp.allclose(fine2, ref_fine2, atol=1e-5, rtol=1e-5)
    assert jnp.allclose(sent2, ref_sent2, atol=1e-5, rtol=1e-5)

    print("KERNEL_OK")
</pallas_src>

<mosaic_0001>
module attributes {stable_mosaic.version = 11 : i64} {
  func.func @calo_classifier_kernel(%arg0: i32, %arg1: memref<8x32xf32, #tpu.memory_space<vmem>>, %arg2: memref<32x64xf32, #tpu.memory_space<vmem>>, %arg3: memref<1x64xf32, #tpu.memory_space<vmem>>, %arg4: memref<64x25xf32, #tpu.memory_space<vmem>>, %arg5: memref<1x25xf32, #tpu.memory_space<vmem>>, %arg6: memref<8x25xf32, #tpu.memory_space<vmem>>) attributes {dimension_semantics = [#tpu.dimension_semantics<parallel>], iteration_bounds = array<i64: 1>, scalar_prefetch = 0 : i64, scratch_operands = 0 : i64, tpu.core_type = #tpu.core_type<tc>, window_params = [{transform_indices = @transform_0, window_bounds = array<i64: 8, 32>}, {pipeline_mode = #tpu.pipeline_mode<synchronous>, transform_indices = @transform_1, window_bounds = array<i64: 32, 64>}, {pipeline_mode = #tpu.pipeline_mode<synchronous>, transform_indices = @transform_2, window_bounds = array<i64: 1, 64>}, {pipeline_mode = #tpu.pipeline_mode<synchronous>, transform_indices = @transform_3, window_bounds = array<i64: 64, 25>}, {pipeline_mode = #tpu.pipeline_mode<synchronous>, transform_indices = @transform_4, window_bounds = array<i64: 1, 25>}, {transform_indices = @transform_5, window_bounds = array<i64: 8, 25>}]} {
    %c0 = arith.constant 0 : index
    %c0_0 = arith.constant 0 : index
    %0 = vector.load %arg1[%c0, %c0_0] : memref<8x32xf32, #tpu.memory_space<vmem>>, vector<8x32xf32>
    %c0_1 = arith.constant 0 : index
    %c0_2 = arith.constant 0 : index
    %1 = vector.load %arg2[%c0_1, %c0_2] : memref<32x64xf32, #tpu.memory_space<vmem>>, vector<32x64xf32>
    %cst = arith.constant dense<0.000000e+00> : vector<8x64xf32>
    %2 = tpu.matmul %0, %1, %cst {dimension_numbers = #tpu.dot_dimension_numbers<[1], [0], [0], [1], [0, 0, 1, 1], [], []>} : vector<8x32xf32>, vector<32x64xf32>, vector<8x64xf32> -> vector<8x64xf32>
    %c0_3 = arith.constant 0 : index
    %c0_4 = arith.constant 0 : index
    %3 = vector.load %arg3[%c0_3, %c0_4] : memref<1x64xf32, #tpu.memory_space<vmem>>, vector<1x64xf32>
    %4 = vector.broadcast %3 : vector<1x64xf32> to vector<8x64xf32>
    %5 = arith.addf %2, %4 : vector<8x64xf32>
    %cst_5 = arith.constant 0.000000e+00 : f32
    %6 = vector.broadcast %cst_5 : f32 to vector<8x64xf32>
    %7 = arith.maximumf %5, %6 : vector<8x64xf32>
    %c0_6 = arith.constant 0 : index
    %c0_7 = arith.constant 0 : index
    %8 = vector.load %arg4[%c0_6, %c0_7] : memref<64x25xf32, #tpu.memory_space<vmem>>, vector<64x25xf32>
    %cst_8 = arith.constant dense<0.000000e+00> : vector<8x25xf32>
    %9 = tpu.matmul %7, %8, %cst_8 {dimension_numbers = #tpu.dot_dimension_numbers<[1], [0], [0], [1], [0, 0, 1, 1], [], []>} : vector<8x64xf32>, vector<64x25xf32>, vector<8x25xf32> -> vector<8x25xf32>
    %c0_9 = arith.constant 0 : index
    %c0_10 = arith.constant 0 : index
    %10 = vector.load %arg5[%c0_9, %c0_10] : memref<1x25xf32, #tpu.memory_space<vmem>>, vector<1x25xf32>
    %11 = vector.broadcast %10 : vector<1x25xf32> to vector<8x25xf32>
    %12 = arith.addf %9, %11 : vector<8x25xf32>
    %c0_11 = arith.constant 0 : index
    %c0_12 = arith.constant 0 : index
    %13 = vector.load %arg6[%c0_11, %c0_12] : memref<8x25xf32, #tpu.memory_space<vmem>>, vector<8x25xf32>
    tpu.vector_store %arg6[%c0_11, %c0_12], %12 {strides = array<i32>} : memref<8x25xf32, #tpu.memory_space<vmem>>, vector<8x25xf32>,
    return
  }
  func.func @transform_0(%arg0: i32) -> (i32, i32) {
    %c0_i32 = arith.constant 0 : i32
    %c0_i32_0 = arith.constant 0 : i32
    return %arg0, %c0_i32 : i32, i32
  }
  func.func @transform_1(%arg0: i32) -> (i32, i32) {
    %c0_i32 = arith.constant 0 : i32
    %c0_i32_0 = arith.constant 0 : i32
    %c0_i32_1 = arith.constant 0 : i32
    return %c0_i32, %c0_i32_0 : i32, i32
  }
  func.func @transform_2(%arg0: i32) -> (i32, i32) {
    %c0_i32 = arith.constant 0 : i32
    %c0_i32_0 = arith.constant 0 : i32
    %c0_i32_1 = arith.constant 0 : i32
    return %c0_i32, %c0_i32_0 : i32, i32
  }
  func.func @transform_3(%arg0: i32) -> (i32, i32) {
    %c0_i32 = arith.constant 0 : i32
    %c0_i32_0 = arith.constant 0 : i32
    %c0_i32_1 = arith.constant 0 : i32
    return %c0_i32, %c0_i32_0 : i32, i32
  }
  func.func @transform_4(%arg0: i32) -> (i32, i32) {
    %c0_i32 = arith.constant 0 : i32
    %c0_i32_0 = arith.constant 0 : i32
    %c0_i32_1 = arith.constant 0 : i32
    return %c0_i32, %c0_i32_0 : i32, i32
  }
  func.func @transform_5(%arg0: i32) -> (i32, i32) {
    %c0_i32 = arith.constant 0 : i32
    %c0_i32_0 = arith.constant 0 : i32
    return %arg0, %c0_i32 : i32, i32
  }
}

</mosaic_0001>

<llo_original>
// kernel: calo_classifier.1
$region0: #{calo_classifier.1}
  #allocation0 [shape = 'u32[]', space=smem, size = 0x4, offset = 0x4, fixed_abs, tag = 'smem constant byte address 0x4 - core index']
  #allocation1 [shape = 'u32[144,128]{1,0:T(1,128)}', space=vmem, size = 0x12000, scoped, tag = 'internal scratch']
  %s0 = inlined_call_operand.vmem [shape: f32[8,32], index: 0, kind: input, shape index: {}]
  %s1 = inlined_call_operand.vmem [shape: f32[32,64], index: 1, kind: input, shape index: {}]
  %s2 = inlined_call_operand.vmem [shape: f32[1,64], index: 2, kind: input, shape index: {}]
  %s3 = inlined_call_operand.vmem [shape: f32[64,25], index: 3, kind: input, shape index: {}]
  %s4 = inlined_call_operand.vmem [shape: f32[1,25], index: 4, kind: input, shape index: {}]
  %s5 = inlined_call_operand.vmem [shape: f32[8,25], index: 5, kind: output, shape index: {}]
  %s6 = sld [smem:[#allocation0]]
  $region30: #{calo_classifier.1} parent=0
    _
  %s8 = ssub.s32 1, %s6
  %s9 = scalar_select 0, %s8, %s6
  // Predicated region
  $region2: #{calo_classifier.1} parent=0 // pred_check
    _
  $region3: #{calo_classifier.1} parent=0 // pred_check_branch
    %11 = sbr.rel (0) target = $region5
  $region4: #{calo_classifier.1} parent=0 // pred_region
    _
  $region5: #{calo_classifier.1} parent=0 // pred_fallthru
    _
  // Predicated region
  $region6: #{calo_classifier.1} parent=0 // pred_check
    _
  $region7: #{calo_classifier.1} parent=0 // pred_check_branch
    %13 = sbr.rel (0) target = $region9
  $region8: #{calo_classifier.1} parent=0 // pred_region
    _
  $region9: #{calo_classifier.1} parent=0 // pred_fallthru
    _
  // Predicated region
  $region10: #{calo_classifier.1} parent=0 // pred_check
    _
  $region11: #{calo_classifier.1} parent=0 // pred_check_branch
    %15 = sbr.rel (0) target = $region13
  $region12: #{calo_classifier.1} parent=0 // pred_region
    _
  $region13: #{calo_classifier.1} parent=0 // pred_fallthru
    _
  // Predicated region
  $region14: #{calo_classifier.1} parent=0 // pred_check
    _
  $region15: #{calo_classifier.1} parent=0 // pred_check_branch
    %17 = sbr.rel (0) target = $region17
  $region16: #{calo_classifier.1} parent=0 // pred_region
    _
  $region17: #{calo_classifier.1} parent=0 // pred_fallthru
    _
  // Predicated region
  $region18: #{calo_classifier.1} parent=0 // pred_check
    _
  $region19: #{calo_classifier.1} parent=0 // pred_check_branch
    %19 = sbr.rel (0) target = $region21
  $region20: #{calo_classifier.1} parent=0 // pred_region
    _
  $region21: #{calo_classifier.1} parent=0 // pred_fallthru
    _
  %v20 = vld [vmem:[%s0] sm:$0xff]
  %v21 = vld [vmem:[%s1] sm:$0xff]
  %v22 = vld [vmem:[%s1 + $0x8] sm:$0xff]
  %v23 = vld [vmem:[%s1 + $0x10] sm:$0xff]
  %v24 = vld [vmem:[%s1 + $0x18] sm:$0xff]
  %v25 = vld [vmem:[%s2] sm:$0x1]
  %v27 = vlaneseq
  %v28 = vshrl.u32 %v27, 7
  %v29 = vsub.s32 0, %v28
  %v30 = vrot.slane %v25, %v29
  %vm32 = vcmask 261120
  %v34 = vsel %vm32, %v20, 0
  %36 = vmatprep.subr.mxu0 0.0
  %37 = vmatpush1.msra.mxu0 0.0
  %38 = vmatprep.subr.mxu0 0.0
  %39 = vmatpush1.msra.mxu0 0.0
  %40 = vmatprep.subr.mxu0 0.0
  %41 = vmatpush1.msra.mxu0 0.0
  %42 = vmatprep.subr.mxu0 0.0
  %43 = vmatpush1.msra.mxu0 0.0
  %44 = vmatprep.subr.mxu0 0.0
  %45 = vmatpush1.msra.mxu0 0.0
  %46 = vmatprep.subr.mxu0 0.0
  %47 = vmatpush1.msra.mxu0 0.0
  %48 = vmatprep.subr.mxu0 0.0
  %49 = vmatpush1.msra.mxu0 0.0
  %50 = vmatprep.subr.mxu0 0.0
  %51 = vmatpush1.msra.mxu0 0.0
  %52 = vmatprep.subr.mxu0 0.0
  %53 = vmatpush1.msra.mxu0 0.0
  %54 = vmatprep.subr.mxu0 0.0
  %55 = vmatpush1.msra.mxu0 0.0
  %56 = vmatprep.subr.mxu0 0.0
  %57 = vmatpush1.msra.mxu0 0.0
  %58 = vmatprep.subr.mxu0 0.0
  %59 = vmatpush1.msra.mxu0 0.0
  %60 = vmatprep.subr.mxu0 0.0
  %61 = vmatpush1.msra.mxu0 %v24
  %62 = vmatprep.subr.mxu0 0.0
  %63 = vmatpush1.msra.mxu0 %v23
  %64 = vmatprep.subr.mxu0 0.0
  %65 = vmatpush1.msra.mxu0 %v22
  %66 = vmatprep.subr.mxu0 0.0
  %67 = vmatpush1.msra.mxu0 %v21
  %68 = vmatprep.subr.mxu0 0.0
  %69 = vmatpush2.msra.mxu0 0.0
  %70 = vmatprep.subr.mxu0 0.0
  %71 = vmatpush2.msra.mxu0 0.0
  %72 = vmatprep.subr.mxu0 0.0
  %73 = vmatpush2.msra.mxu0 0.0
  %74 = vmatprep.subr.mxu0 0.0
  %75 = vmatpush2.msra.mxu0 0.0
  %76 = vmatprep.subr.mxu0 0.0
  %77 = vmatpush2.msra.mxu0 0.0
  %78 = vmatprep.subr.mxu0 0.0
  %79 = vmatpush2.msra.mxu0 0.0
  %80 = vmatprep.subr.mxu0 0.0
  %81 = vmatpush2.msra.mxu0 0.0
  %82 = vmatprep.subr.mxu0 0.0
  %83 = vmatpush2.msra.mxu0 0.0
  %84 = vmatprep.subr.mxu0 0.0
  %85 = vmatpush2.msra.mxu0 0.0
  %86 = vmatprep.subr.mxu0 0.0
  %87 = vmatpush2.msra.mxu0 0.0
  %88 = vmatprep.subr.mxu0 0.0
  %89 = vmatpush2.msra.mxu0 0.0
  %90 = vmatprep.subr.mxu0 0.0
  %91 = vmatpush2.msra.mxu0 0.0
  %92 = vmatprep.subr.mxu0 0.0
  %93 = vmatpush2.msra.mxu0 0.0
  %94 = vmatprep.subr.mxu0 0.0
  %95 = vmatpush2.msra.mxu0 0.0
  %96 = vmatprep.subr.mxu0 0.0
  %97 = vmatpush2.msra.mxu0 0.0
  %98 = vmatprep.subr.mxu0 0.0
  %99 = vmatpush2.msra.mxu0 0.0
  %100 = vmatprep.mubr.f32.mxu0 0.0
  %101 = vmatmul.mubr.f32.gmra.mxu0 %v34
  %v102 = vpop.f32.mrf.mxu0
  %v103 = vadd.f32 %v30, %v102
  %v104 = vpop.f32.mrf.mxu0
  %105 = vdwg.mxu0
  %v106 = vmax.f32 %v103, 0.0
  %v107 = vld [vmem:[%s3] sm:$0xff]
  %v108 = vld [vmem:[%s3 + $0x8] sm:$0xff]
  %v109 = vld [vmem:[%s3 + $0x10] sm:$0xff]
  %v110 = vld [vmem:[%s3 + $0x18] sm:$0xff]
  %v111 = vld [vmem:[%s3 + $0x20] sm:$0xff]
  %v112 = vld [vmem:[%s3 + $0x28] sm:$0xff]
  %v113 = vld [vmem:[%s3 + $0x30] sm:$0xff]
  %v114 = vld [vmem:[%s3 + $0x38] sm:$0xff]
  %v115 = vld [vmem:[%s4] sm:$0x1]
  %v117 = vlaneseq
  %v118 = vshrl.u32 %v117, 7
  %v119 = vsub.s32 0, %v118
  %v120 = vrot.slane %v115, %v119
  %vm122 = vcmask 523264
  %v124 = vsel %vm122, %v106, 0
  %126 = vmatprep.subr.mxu0 0.0
  %127 = vmatpush1.msra.mxu0 0.0
  %128 = vmatprep.subr.mxu0 0.0
  %129 = vmatpush1.msra.mxu0 0.0
  %130 = vmatprep.subr.mxu0 0.0
  %131 = vmatpush1.msra.mxu0 0.0
  %132 = vmatprep.subr.mxu0 0.0
  %133 = vmatpush1.msra.mxu0 0.0
  %134 = vmatprep.subr.mxu0 0.0
  %135 = vmatpush1.msra.mxu0 0.0
  %136 = vmatprep.subr.mxu0 0.0
  %137 = vmatpush1.msra.mxu0 0.0
  %138 = vmatprep.subr.mxu0 0.0
  %139 = vmatpush1.msra.mxu0 0.0
  %140 = vmatprep.subr.mxu0 0.0
  %141 = vmatpush1.msra.mxu0 0.0
  %142 = vmatprep.subr.mxu0 0.0
  %143 = vmatpush1.msra.mxu0 %v114
  %144 = vmatprep.subr.mxu0 0.0
  %145 = vmatpush1.msra.mxu0 %v113
  %146 = vmatprep.subr.mxu0 0.0
  %147 = vmatpush1.msra.mxu0 %v112
  %148 = vmatprep.subr.mxu0 0.0
  %149 = vmatpush1.msra.mxu0 %v111
  %150 = vmatprep.subr.mxu0 0.0
  %151 = vmatpush1.msra.mxu0 %v110
  %152 = vmatprep.subr.mxu0 0.0
  %153 = vmatpush1.msra.mxu0 %v109
  %154 = vmatprep.subr.mxu0 0.0
  %155 = vmatpush1.msra.mxu0 %v108
  %156 = vmatprep.subr.mxu0 0.0
  %157 = vmatpush1.msra.mxu0 %v107
  %158 = vmatprep.subr.mxu0 0.0
  %159 = vmatpush2.msra.mxu0 0.0
  %160 = vmatprep.subr.mxu0 0.0
  %161 = vmatpush2.msra.mxu0 0.0
  %162 = vmatprep.subr.mxu0 0.0
  %163 = vmatpush2.msra.mxu0 0.0
  %164 = vmatprep.subr.mxu0 0.0
  %165 = vmatpush2.msra.mxu0 0.0
  %166 = vmatprep.subr.mxu0 0.0
  %167 = vmatpush2.msra.mxu0 0.0
  %168 = vmatprep.subr.mxu0 0.0
  %169 = vmatpush2.msra.mxu0 0.0
  %170 = vmatprep.subr.mxu0 0.0
  %171 = vmatpush2.msra.mxu0 0.0
  %172 = vmatprep.subr.mxu0 0.0
  %173 = vmatpush2.msra.mxu0 0.0
  %174 = vmatprep.subr.mxu0 0.0
  %175 = vmatpush2.msra.mxu0 0.0
  %176 = vmatprep.subr.mxu0 0.0
  %177 = vmatpush2.msra.mxu0 0.0
  %178 = vmatprep.subr.mxu0 0.0
  %179 = vmatpush2.msra.mxu0 0.0
  %180 = vmatprep.subr.mxu0 0.0
  %181 = vmatpush2.msra.mxu0 0.0
  %182 = vmatprep.subr.mxu0 0.0
  %183 = vmatpush2.msra.mxu0 0.0
  %184 = vmatprep.subr.mxu0 0.0
  %185 = vmatpush2.msra.mxu0 0.0
  %186 = vmatprep.subr.mxu0 0.0
  %187 = vmatpush2.msra.mxu0 0.0
  %188 = vmatprep.subr.mxu0 0.0
  %189 = vmatpush2.msra.mxu0 0.0
  %190 = vmatprep.mubr.f32.mxu0 0.0
  %191 = vmatmul.mubr.f32.gmra.mxu0 %v124
  %v192 = vpop.f32.mrf.mxu0
  %v193 = vadd.f32 %v120, %v192
  %v194 = vpop.f32.mrf.mxu0
  %195 = vdwg.mxu0
  %vm196 = vcmask 203776
  %197 = vst.msk [vmem:[%s5] sm:$0xff] %vm196, %v193
  // Predicated region
  $region22: #{calo_classifier.1} parent=0 // pred_check
    _
  $region23: #{calo_classifier.1} parent=0 // pred_check_branch
    %199 = sbr.rel (0) target = $region25
  $region24: #{calo_classifier.1} parent=0 // pred_region
    _
  $region25: #{calo_classifier.1} parent=0 // pred_fallthru
    _
  // Predicated region
  $region26: #{calo_classifier.1} parent=0 // pred_check
    _
  $region27: #{calo_classifier.1} parent=0 // pred_check_branch
    %201 = sbr.rel (0) target = $region29
  $region28: #{calo_classifier.1} parent=0 // pred_region
    _
  $region29: #{calo_classifier.1} parent=0 // pred_fallthru
    _

</llo_original>
